<compile_context>
chip_gen: v6e
topology: v6e:2x2x1
jax: 0.10.0
libtpu: 0.0.40
codegen_flags: <defaults>
</compile_context>

<pallas_src>
import jax
import jax.numpy as jnp
from jax.experimental import pallas as pl
from jax.experimental.pallas import tpu as pltpu


def _compute_power_kernel(r_ref, i_ref, o_ref):
    # r_ref / i_ref: lane-aligned (tile_b, tile_h) views of the real / imag halves.
    r = r_ref[...].astype(jnp.float32)
    im = i_ref[...].astype(jnp.float32)
    o_ref[...] = (r * r + im * im).astype(o_ref.dtype)


def _sublane_multiple(dtype):
    itemsize = jnp.dtype(dtype).itemsize
    return max(8, 32 // itemsize)  # 8 for f32, 16 for bf16, 32 for int8/fp8


def _pick_tile_h(half, sublane, itemsize, budget):
    """Widest feature tile: full half if it fits a minimal-row tile in the
    byte budget, else the largest 128-multiple divisor of half that does."""
    max_h = max(128, (budget // (sublane * itemsize)) // 128 * 128)
    if half <= max_h:
        return half
    best = 128
    d = 128
    while d <= max_h:
        if half % d == 0:
            best = d
        d += 128
    return best


def _compute_power_aligned(x, half, target_tile_bytes):
    """Fast path: half is a multiple of 128. x has shape (B, 2*half)."""
    B = x.shape[0]
    dtype = x.dtype
    itemsize = jnp.dtype(dtype).itemsize
    sublane = _sublane_multiple(dtype)

    # Feature tile first (wide = long contiguous DMA rows, lane-dense stores),
    # then fill the per-buffer byte budget with batch rows.
    tile_h = _pick_tile_h(half, sublane, itemsize, target_tile_bytes)
    rows = max(1, target_tile_bytes // (tile_h * itemsize))
    if B <= sublane:
        tile_b = B  # full-dim block is always legal
    else:
        tile_b = max(sublane, (rows // sublane) * sublane)
        tile_b = min(tile_b, (B // sublane) * sublane)

    grid_b = pl.cdiv(B, tile_b)          # ragged last block is fine (elementwise)
    grid_h = half // tile_h              # tile_h divides half by construction
    h_blocks = grid_h                    # block-index offset of the imag half

    # Lead with the axis that has more blocks so a 2-TC chip (v7x) shards it.
    if grid_b >= grid_h:
        grid = (grid_b, grid_h)
        real_map = lambda i, j: (i, j)
        imag_map = lambda i, j: (i, j + h_blocks)
        out_map = lambda i, j: (i, j)
    else:
        grid = (grid_h, grid_b)
        real_map = lambda j, i: (i, j)
        imag_map = lambda j, i: (i, j + h_blocks)
        out_map = lambda j, i: (i, j)

    # Double-buffered footprint: 2 bufs x (real + imag + out) tiles.
    footprint = 6 * tile_b * tile_h * itemsize
    vmem_limit = min(64 << 20, max(32 << 20, int(footprint * 2)))

    cost = pl.CostEstimate(
        flops=3 * B * half,
        transcendentals=0,
        bytes_accessed=B * 2 * half * itemsize + B * half * itemsize,
    )

    return pl.pallas_call(
        _compute_power_kernel,
        out_shape=jax.ShapeDtypeStruct((B, half), dtype),
        grid_spec=pltpu.PrefetchScalarGridSpec(
            num_scalar_prefetch=0,
            grid=grid,
            in_specs=[
                pl.BlockSpec((tile_b, tile_h), real_map),   # real half of x
                pl.BlockSpec((tile_b, tile_h), imag_map),   # imag half of x
            ],
            out_specs=pl.BlockSpec((tile_b, tile_h), out_map),
        ),
        compiler_params=pltpu.CompilerParams(
            dimension_semantics=("parallel", "parallel"),
            vmem_limit_bytes=vmem_limit,
        ),
        cost_estimate=cost,
    )(x, x)


def compute_power(x, *, target_tile_bytes=2 << 20):
    """Pallas equivalent of ComputePower.forward.

    x: (B, F) array, F even. Returns (B, F//2) = x_real**2 + x_imag**2.
    """
    B, F = x.shape
    assert F % 2 == 0, "feature dimension must be even (real/imag halves)"
    half = F // 2

    pad = (-half) % 128
    if pad == 0:
        return _compute_power_aligned(x, half, target_tile_bytes)

    # Misaligned F/2: pad each half to the next 128 multiple in the wrapper and
    # reuse the lane-aligned fast path (avoids in-kernel cross-lane slicing and
    # masked partial stores).
    # TODO(synk): the pad/concat/slice are extra XLA copies; a manual-DMA
    # (memory_space=pl.ANY) gather into lane-aligned scratch would avoid them.
    real = jnp.pad(x[:, :half], ((0, 0), (0, pad)))
    imag = jnp.pad(x[:, half:], ((0, 0), (0, pad)))
    xp = jnp.concatenate([real, imag], axis=1)
    out = _compute_power_aligned(xp, half + pad, target_tile_bytes)
    return out[:, :half]


def _reference(x):
    half = x.shape[1] // 2
    x32 = x.astype(jnp.float32)
    return (x32[:, :half] ** 2 + x32[:, half:] ** 2).astype(x.dtype)


if __name__ == "__main__":
    key = jax.random.PRNGKey(0)
    k0, k1, k2, k3, k4 = jax.random.split(key, 5)

    # Small shape matching the module spec (in_shape = 256 -> len_real = 128).
    x_small = jax.random.normal(k0, (4, 256), dtype=jnp.float32)
    out_small = jax.block_until_ready(compute_power(x_small))
    assert out_small.shape == (4, 128)
    assert jnp.allclose(out_small, _reference(x_small), atol=1e-6, rtol=1e-6)

    # Larger f32 case (full-width feature tile).
    x_big = jax.random.normal(k1, (64, 2048), dtype=jnp.float32)
    out_big = jax.block_until_ready(compute_power(x_big))
    assert out_big.shape == (64, 1024)
    assert jnp.allclose(out_big, _reference(x_big), atol=1e-6, rtol=1e-6)

    # Ragged-batch case: B not a multiple of the sublane tile, small budget to
    # force a multi-step cdiv grid with a partial last block.
    x_ragged = jax.random.normal(k2, (13, 512), dtype=jnp.float32)
    out_ragged = jax.block_until_ready(
        compute_power(x_ragged, target_tile_bytes=8192))
    assert out_ragged.shape == (13, 256)
    assert jnp.allclose(out_ragged, _reference(x_ragged), atol=1e-6, rtol=1e-6)

    # Non-128-aligned half: goes through the padded wrapper path.
    x_odd = jax.random.normal(k3, (6, 100), dtype=jnp.float32)
    out_odd = jax.block_until_ready(compute_power(x_odd))
    assert out_odd.shape == (6, 50)
    assert jnp.allclose(out_odd, _reference(x_odd), atol=1e-6, rtol=1e-6)

    # bf16 case: kernel computes in f32, casts back.
    x_bf16 = jax.random.normal(k4, (32, 512), dtype=jnp.bfloat16)
    out_bf16 = jax.block_until_ready(compute_power(x_bf16))
    assert out_bf16.shape == (32, 256)
    assert jnp.allclose(out_bf16.astype(jnp.float32),
                        _reference(x_bf16).astype(jnp.float32),
                        atol=1e-2, rtol=1e-2)

    print("KERNEL_OK")
</pallas_src>

<mosaic_0001>
module attributes {stable_mosaic.version = 11 : i64} {
  func.func @_compute_power_kernel(%arg0: i32, %arg1: i32, %arg2: memref<4x128xf32, #tpu.memory_space<vmem>>, %arg3: memref<4x128xf32, #tpu.memory_space<vmem>>, %arg4: memref<4x128xf32, #tpu.memory_space<vmem>>) attributes {dimension_semantics = [#tpu.dimension_semantics<parallel>, #tpu.dimension_semantics<parallel>], iteration_bounds = array<i64: 1, 1>, scalar_prefetch = 0 : i64, scratch_operands = 0 : i64, tpu.core_type = #tpu.core_type<tc>, window_params = [{transform_indices = @transform_0, window_bounds = array<i64: 4, 128>}, {transform_indices = @transform_1, window_bounds = array<i64: 4, 128>}, {transform_indices = @transform_2, window_bounds = array<i64: 4, 128>}]} {
    %c0 = arith.constant 0 : index
    %c0_0 = arith.constant 0 : index
    %0 = vector.load %arg2[%c0, %c0_0] : memref<4x128xf32, #tpu.memory_space<vmem>>, vector<4x128xf32>
    %c0_1 = arith.constant 0 : index
    %c0_2 = arith.constant 0 : index
    %1 = vector.load %arg3[%c0_1, %c0_2] : memref<4x128xf32, #tpu.memory_space<vmem>>, vector<4x128xf32>
    %2 = arith.mulf %0, %0 : vector<4x128xf32>
    %3 = arith.mulf %1, %1 : vector<4x128xf32>
    %4 = arith.addf %2, %3 : vector<4x128xf32>
    %c0_3 = arith.constant 0 : index
    %c0_4 = arith.constant 0 : index
    %5 = vector.load %arg4[%c0_3, %c0_4] : memref<4x128xf32, #tpu.memory_space<vmem>>, vector<4x128xf32>
    tpu.vector_store %arg4[%c0_3, %c0_4], %4 {strides = array<i32>} : memref<4x128xf32, #tpu.memory_space<vmem>>, vector<4x128xf32>,
    return
  }
  func.func @transform_0(%arg0: i32, %arg1: i32) -> (i32, i32) {
    %c0_i32 = arith.constant 0 : i32
    return %arg0, %arg1 : i32, i32
  }
  func.func @transform_1(%arg0: i32, %arg1: i32) -> (i32, i32) {
    %c1_i32 = arith.constant 1 : i32
    %0 = arith.addi %arg1, %c1_i32 : i32
    %c0_i32 = arith.constant 0 : i32
    return %arg0, %0 : i32, i32
  }
  func.func @transform_2(%arg0: i32, %arg1: i32) -> (i32, i32) {
    %c0_i32 = arith.constant 0 : i32
    return %arg0, %arg1 : i32, i32
  }
}

</mosaic_0001>

<llo_original>
// kernel: tpu_custom_call.1
$region0: #{tpu_custom_call.1}
  #allocation0 [shape = 'u32[]', space=smem, size = 0x4, offset = 0x4, fixed_abs, tag = 'smem constant byte address 0x4 - core index']
  #allocation1 [shape = 'u32[144,128]{1,0:T(1,128)}', space=vmem, size = 0x12000, scoped, tag = 'internal scratch']
  %s0 = inlined_call_operand.hbm [shape: f32[4,256], index: 0, kind: input, shape index: {}]
  %s1 = inlined_call_operand.hbm [shape: f32[4,256], index: 1, kind: input, shape index: {}]
  %s2 = inlined_call_operand.hbm [shape: f32[4,128], index: 2, kind: output, shape index: {}]
  %s3 = sld [smem:[#allocation0]]
  $region26: #{tpu_custom_call.1} parent=0
    _
  %s5 = ssub.s32 1, %s3
  %s6 = scalar_select 0, %s5, %s3
  $region1: #{tpu_custom_call.1} parent=0
    #allocation2 [shape = 'u8[2048]{0}', space=vmem, size = 0x800, scoped, tag = 'input window, operand 0, single buffered']
    #allocation3 [shape = 's32[1]{0}', space=sflag, size = 0x4, scoped, tag = 'scoped memory for tpu_custom_call.1']
    #allocation4 [shape = 's32[1]{0}', space=sflag, size = 0x4, scoped, tag = 'scoped memory for tpu_custom_call.1']
    #allocation5 [shape = 'u8[2048]{0}', space=vmem, size = 0x800, scoped, tag = 'input window, operand 1, single buffered']
    #allocation6 [shape = 's32[1]{0}', space=sflag, size = 0x4, scoped, tag = 'scoped memory for tpu_custom_call.1']
    #allocation7 [shape = 'u8[2048]{0}', space=vmem, size = 0x800, scoped, tag = 'output window, operand 0, single buffered']
    %7 = vsyncpa [#allocation3], 0
    %8 = vsyncpa [#allocation6], 0
    %9 = vsyncpa [#allocation4], 0
    // Predicated region
    $region2: #{tpu_custom_call.1} parent=1 // pred_check
      _
    $region3: #{tpu_custom_call.1} parent=1 // pred_check_branch
      %11 = sbr.rel (0) target = $region5
    $region4: #{tpu_custom_call.1} parent=1 // pred_region
      %s13 = ssub.s32 64, 64
      %14 = vsyncadd [#allocation3], %s13
      %s16 = sshll.u32 [#allocation2], 4
      %s17 = int_to_ptr.vmem [resolvable:$true] %s16
      %19 = dma.hbm_to_vmem [thread:$0]  %s0, 64, %s17, [#allocation3]
    $region5: #{tpu_custom_call.1} parent=1 // pred_fallthru
      _
    // Predicated region
    $region6: #{tpu_custom_call.1} parent=1 // pred_check
      _
    $region7: #{tpu_custom_call.1} parent=1 // pred_check_branch
      %21 = sbr.rel (0) target = $region9
    $region8: #{tpu_custom_call.1} parent=1 // pred_region
      %s22 = sadd.s32 0, 1
      %s24 = ssub.s32 64, 64
      %25 = vsyncadd [#allocation6], %s24
      %s26 = smul.addr %s22, 64
      %s27 = scalar_lea.hbm %s1, %s26
      %s29 = sshll.u32 [#allocation5], 4
      %s30 = int_to_ptr.vmem [resolvable:$true] %s29
      %32 = dma.hbm_to_vmem [thread:$0]  %s27, 64, %s30, [#allocation6]
    $region9: #{tpu_custom_call.1} parent=1 // pred_fallthru
      _
    // Predicated region
    $region10: #{tpu_custom_call.1} parent=1 // pred_check
      _
    $region11: #{tpu_custom_call.1} parent=1 // pred_check_branch
      %34 = sbr.rel (0) target = $region13
    $region12: #{tpu_custom_call.1} parent=1 // pred_region
      %35 = dma.done [#allocation3], 64
    $region13: #{tpu_custom_call.1} parent=1 // pred_fallthru
      _
    // Predicated region
    $region14: #{tpu_custom_call.1} parent=1 // pred_check
      _
    $region15: #{tpu_custom_call.1} parent=1 // pred_check_branch
      %37 = sbr.rel (0) target = $region17
    $region16: #{tpu_custom_call.1} parent=1 // pred_region
      %38 = dma.done [#allocation6], 64
    $region17: #{tpu_custom_call.1} parent=1 // pred_fallthru
      _
    %s39 = sadd.s32 0, 1
    %v40 = vld [vmem:[#allocation2] sm:$0xf]
    %v41 = vld [vmem:[#allocation5] sm:$0xf]
    %v42 = vmul.f32 %v40, %v40
    %v43 = vmul.f32 %v41, %v41
    %v44 = vadd.f32 %v42, %v43
    %45 = vst [vmem:[#allocation7] sm:$0xf] %v44
    // Predicated region
    $region18: #{tpu_custom_call.1} parent=1 // pred_check
      _
    $region19: #{tpu_custom_call.1} parent=1 // pred_check_branch
      %47 = sbr.rel (0) target = $region21
    $region20: #{tpu_custom_call.1} parent=1 // pred_region
      %s49 = ssub.s32 64, 64
      %50 = vsyncadd [#allocation4], %s49
      %s52 = sshll.u32 [#allocation7], 4
      %s53 = int_to_ptr.vmem [resolvable:$true] %s52
      %55 = dma.vmem_to_hbm [thread:$0]  %s53, 64, %s2, [#allocation4]
    $region21: #{tpu_custom_call.1} parent=1 // pred_fallthru
      _
    // Predicated region
    $region22: #{tpu_custom_call.1} parent=1 // pred_check
      _
    $region23: #{tpu_custom_call.1} parent=1 // pred_check_branch
      %57 = sbr.rel (0) target = $region25
    $region24: #{tpu_custom_call.1} parent=1 // pred_region
      %58 = dma.done [#allocation4], 64
    $region25: #{tpu_custom_call.1} parent=1 // pred_fallthru
      _
    %59 = vsyncpa [#allocation3], 1
    %60 = vsyncpa [#allocation6], 1
    %61 = vsyncpa [#allocation4], 1

</llo_original>
